<compile_context>
chip_gen: v6e
topology: v6e:2x2x1
jax: 0.10.0
libtpu: 0.0.40
codegen_flags: <defaults>
</compile_context>

<pallas_src>
import functools

import jax
import jax.numpy as jnp
import numpy as np
from jax.experimental import pallas as pl
from jax.experimental.pallas import tpu as pltpu

_F32_BYTES = 4


# ----------------------------------------------------------------------------
# Table construction (plain JAX glue) — mirrors XPOS._forward_impl exactly.
# Small (S, D) tables; not the hot path.
# ----------------------------------------------------------------------------
def xpos_tables(head_dim, length, offset=0, downscale=False, scale_base=512):
    assert head_dim % 2 == 0, "XPOS rotate-every-two requires an even head_dim"

    # register_buffer('scale', ...)
    scale_buf = (jnp.arange(0, head_dim, 2, dtype=jnp.float32) + 0.4 * head_dim) / (
        1.4 * head_dim
    )  # (D/2,)

    min_pos = -(length + offset) // 2 if offset < 0 else 0
    max_pos = length + offset + min_pos
    positions = jnp.arange(min_pos, max_pos, dtype=jnp.float32)  # (L,)
    scale = scale_buf[None, :] ** (positions / scale_base)[:, None]  # (L, D/2)

    # fixed_pos_embedding(scale): seq_len = L, dim = D//2
    dim = head_dim // 2
    inv_freq = 1.0 / (10000.0 ** (jnp.arange(dim, dtype=jnp.float32) / dim))
    sinusoid = jnp.arange(scale.shape[0], dtype=jnp.float32)[:, None] * inv_freq[None, :]
    sin = jnp.sin(sinusoid)
    cos = jnp.cos(sinusoid)

    if scale.shape[0] > length:
        scale = scale[-length:]
        sin = sin[-length:]
        cos = cos[-length:]
    if downscale:
        scale = 1.0 / scale

    sin_eff = (-sin if offset < 0 else sin) * scale  # (S, D/2)
    cos_eff = cos * scale

    # duplicate_interleave: (S, D/2) -> (S, D)
    sin_dup = jnp.repeat(sin_eff, 2, axis=-1)
    cos_dup = jnp.repeat(cos_eff, 2, axis=-1)
    return sin_dup, cos_dup


def xpos_kernel_tables(sin_dup, cos_dup):
    """Fold rotate_every_two's sign + even/odd select into the sin table.

    out[2i]   = x[2i]  *cos[2i]   - x[2i+1]*sin[2i]     -> uses x_next, sin_a
    out[2i+1] = x[2i+1]*cos[2i+1] + x[2i]  *sin[2i+1]   -> uses x_prev, sin_b

    Tables stay f32 regardless of x dtype (precision; tiny VMEM/HBM cost).
    """
    S, D = sin_dup.shape
    even = (jnp.arange(D) % 2 == 0)[None, :]          # (1, D)
    sin_a = jnp.where(even, -sin_dup, 0.0)            # multiplies x[j+1]
    sin_b = jnp.where(even, 0.0, sin_dup)             # multiplies x[j-1]
    L = S * D
    return (
        sin_a.reshape(1, L).astype(jnp.float32),
        sin_b.reshape(1, L).astype(jnp.float32),
        cos_dup.reshape(1, L).astype(jnp.float32),
    )


@functools.lru_cache(maxsize=64)
def _cached_kernel_tables(head_dim, length, offset, downscale, scale_base):
    # Memoize on the static config: avoids re-launching the table-build XLA ops
    # on every forward call (matters for short-seq / decode-style repeat calls).
    sin_dup, cos_dup = xpos_tables(head_dim, length, offset, downscale, scale_base)
    return xpos_kernel_tables(sin_dup, cos_dup)


# ----------------------------------------------------------------------------
# Pallas kernel: out = x*cos + roll(x,-1)*sin_a + roll(x,+1)*sin_b
# x/o blocks are (TM, TL); sin_a/sin_b/cos blocks are (1, TL), f32.
# Roll wrap-around at block edges always lands on lanes where the
# corresponding sin table is zero (block lane width is even), so it is benign.
# ----------------------------------------------------------------------------
def xpos_kernel(x_ref, sa_ref, sb_ref, c_ref, o_ref):
    x = x_ref[...].astype(jnp.float32)          # (TM, TL); f32 compute
    n = x.shape[-1]
    # result[j] = x[j+1]  (wrap lands only on odd lanes where sin_a == 0)
    x_next = pltpu.roll(x, shift=n - 1, axis=1)
    # result[j] = x[j-1]  (wrap lands only on even lanes where sin_b == 0)
    x_prev = pltpu.roll(x, shift=1, axis=1)
    out = x * c_ref[...] + x_next * sa_ref[...] + x_prev * sb_ref[...]
    o_ref[...] = out.astype(o_ref.dtype)


# ----------------------------------------------------------------------------
# Tiling plan: generation-aware, VMEM-budget checked.
# ----------------------------------------------------------------------------
def _vmem_limit_bytes():
    try:
        cap = int(pltpu.get_tpu_info().vmem_capacity_bytes)
    except Exception:
        cap = 64 * 1024 * 1024          # conservative (v7x-sized) fallback
    return max(32 * 1024 * 1024, cap * 3 // 4)


def _lane_candidates(L):
    # Lane tile must divide L and be a multiple of 128 (lane-dense), or be the
    # full L (full-dim exception).  L = S*D is always even (D even), so rotate
    # pairs never straddle a tile boundary.
    cands = [tl for tl in range(128, L + 1, 128) if L % tl == 0]
    if L not in cands:
        cands.append(L)
    return sorted(cands)


def _row_candidates(BH, sublane):
    cands = [tm for tm in range(sublane, BH + 1, sublane) if BH % tm == 0]
    if BH not in cands:
        cands.append(BH)                # full-dim exception
    return sorted(cands)


def _block_vmem_bytes(tm, tl, itemsize, sublane):
    rows = -(-tm // sublane) * sublane                  # sublane padding of x/out
    x_blk = rows * tl * itemsize
    tbl_blk = 8 * tl * _F32_BYTES                       # (1, tl) f32 pads to 8 sublanes
    # x + out double-buffered, 3 tables double-buffered
    return 2 * (2 * x_blk) + 3 * (2 * tbl_blk)


def _choose_tiles(BH, L, itemsize, sublane, vmem_limit):
    # Narrow lane target (~64 KiB) keeps the sublane-padded table blocks small;
    # the row tile grows instead to reach the per-tile byte target.
    target_lane_elems = max(256, (64 * 1024) // itemsize)
    budget = vmem_limit // 2                            # headroom for compiler scratch
    target_tile_bytes = max(1 << 20, min(8 << 20, budget // 5))

    lane_c = _lane_candidates(L)
    row_c = _row_candidates(BH, sublane)

    best = None
    for tl in lane_c:
        for tm in row_c:
            if _block_vmem_bytes(tm, tl, itemsize, sublane) > budget:
                continue
            tile = tm * tl * itemsize
            key = (tl <= target_lane_elems, min(tile, target_tile_bytes), -tl)
            if best is None or key > best[0]:
                best = (key, tm, tl)
    if best is None:
        return None
    tm, tl = best[1], best[2]

    # Keep the grid even / >= 4 steps for 2-TensorCore parts (v7x) when tiles
    # are large enough to be worth splitting.
    min_tile = 256 * 1024

    def next_smaller(cands, cur):
        smaller = [c for c in cands if c < cur]
        return max(smaller) if smaller else None

    while True:
        n_seq, n_row = L // tl, BH // tm
        if n_seq * n_row >= 4 and not (n_seq % 2 and n_row % 2):
            break
        nt = next_smaller(row_c, tm)
        if nt is not None and nt * tl * itemsize >= min_tile:
            tm = nt
            continue
        nl = next_smaller(lane_c, tl)
        if nl is not None and tm * nl * itemsize >= min_tile:
            tl = nl
            continue
        break
    return tm, tl


def _padded_plan(BH, L, itemsize, sublane, vmem_limit):
    # No unpadded tiling fits the VMEM budget (awkward L with no friendly
    # divisor): lane-pad L up to a multiple of tl.  Padded table lanes are
    # zero, so padded outputs are zero and are sliced away by the wrapper.
    budget = vmem_limit // 2
    target_lane_elems = max(256, (64 * 1024) // itemsize)
    tl = max(256, (target_lane_elems // 256) * 256)
    row_c = _row_candidates(BH, sublane)
    tm = None
    for cand in sorted(row_c, reverse=True):
        if _block_vmem_bytes(cand, tl, itemsize, sublane) <= budget:
            tm = cand
            break
    if tm is None:
        tm = min(row_c)
        while tl > 256 and _block_vmem_bytes(tm, tl, itemsize, sublane) > budget:
            tl -= 256
    L_pad = -(-L // tl) * tl
    return tm, tl, L_pad


# ----------------------------------------------------------------------------
# Wrapper: flatten to (B*H, S*D), tile (seq-lanes, rows), lane-dense BlockSpecs.
# ----------------------------------------------------------------------------
def xpos_apply(x, sin_a, sin_b, cos_d, *, donate_x=False):
    B, H, S, D = x.shape
    BH, L = B * H, S * D
    xf = x.reshape(BH, L)

    itemsize = jnp.dtype(x.dtype).itemsize
    sublane = {4: 8, 2: 16, 1: 32}.get(itemsize, 8)
    vmem_limit = _vmem_limit_bytes()

    plan = _choose_tiles(BH, L, itemsize, sublane, vmem_limit)
    if plan is not None:
        tm, tl = plan
        L_pad = L
    else:
        tm, tl, L_pad = _padded_plan(BH, L, itemsize, sublane, vmem_limit)
        pad = L_pad - L
        xf = jnp.pad(xf, ((0, 0), (0, pad)))
        sin_a = jnp.pad(sin_a, ((0, 0), (0, pad)))
        sin_b = jnp.pad(sin_b, ((0, 0), (0, pad)))
        cos_d = jnp.pad(cos_d, ((0, 0), (0, pad)))

    n_seq = L_pad // tl
    n_row = BH // tm

    extra = {}
    if donate_x:
        # Write the output in place over the flattened x (caller donates x):
        # halves peak HBM footprint at production shapes.
        extra["input_output_aliases"] = {0: 0}

    # Grid: (seq/lane tiles, row tiles) — rows vary fastest, so the table
    # blocks (indexed only by the lane tile) stay resident across the inner
    # row loop and are only re-DMA'd n_seq times.
    out = pl.pallas_call(
        xpos_kernel,
        out_shape=jax.ShapeDtypeStruct((BH, L_pad), x.dtype),
        grid_spec=pltpu.PrefetchScalarGridSpec(
            num_scalar_prefetch=0,
            grid=(n_seq, n_row),
            in_specs=[
                pl.BlockSpec((tm, tl), lambda si, ri: (ri, si)),
                pl.BlockSpec((1, tl), lambda si, ri: (0, si)),
                pl.BlockSpec((1, tl), lambda si, ri: (0, si)),
                pl.BlockSpec((1, tl), lambda si, ri: (0, si)),
            ],
            out_specs=pl.BlockSpec((tm, tl), lambda si, ri: (ri, si)),
        ),
        compiler_params=pltpu.CompilerParams(
            dimension_semantics=("parallel", "parallel"),
            vmem_limit_bytes=vmem_limit,
        ),
        **extra,
    )(xf, sin_a, sin_b, cos_d)

    if L_pad != L:
        out = out[:, :L]
    return out.reshape(B, H, S, D)


def xpos_forward(x, head_dim=None, offset=0, downscale=False, scale_base=512,
                 donate_x=False):
    """Equivalent of XPOS(head_dim, scale_base).forward(x, offset, downscale)."""
    if head_dim is None:
        head_dim = x.shape[-1]
    length = x.shape[2]
    sin_a, sin_b, cos_d = _cached_kernel_tables(
        int(head_dim), int(length), int(offset), bool(downscale), int(scale_base))
    return xpos_apply(x, sin_a, sin_b, cos_d, donate_x=donate_x)


# ----------------------------------------------------------------------------
# Pure-JAX reference (mirrors the PyTorch code) for a correctness check.
# ----------------------------------------------------------------------------
def xpos_ref(x, sin_dup, cos_dup):
    x1 = x[..., ::2]
    x2 = x[..., 1::2]
    rot = jnp.stack((-x2, x1), axis=-1).reshape(x.shape)
    return x * cos_dup + rot * sin_dup


if __name__ == "__main__":
    key = jax.random.PRNGKey(0)

    # Test 1: small f32 case matching the module's natural shapes.
    B, H, S, D = 2, 4, 8, 32
    k1, k2, k3 = jax.random.split(key, 3)
    x = jax.random.normal(k1, (B, H, S, D), dtype=jnp.float32)
    out = jax.block_until_ready(xpos_forward(x, head_dim=D))
    sin_dup, cos_dup = xpos_tables(D, S)
    ref = xpos_ref(x, sin_dup, cos_dup)
    np.testing.assert_allclose(np.asarray(out), np.asarray(ref), rtol=1e-5, atol=1e-5)

    # Test 2: longer sequence exercising a multi-tile lane grid (f32).
    B2, H2, S2, D2 = 1, 2, 256, 128
    x2 = jax.random.normal(k2, (B2, H2, S2, D2), dtype=jnp.float32)
    out2 = jax.block_until_ready(xpos_forward(x2, head_dim=D2))
    sin2, cos2 = xpos_tables(D2, S2)
    ref2 = xpos_ref(x2, sin2, cos2)
    np.testing.assert_allclose(np.asarray(out2), np.asarray(ref2), rtol=1e-5, atol=1e-5)

    # Test 3: bf16 input — tables stay f32, cast only at the output store.
    B3, H3, S3, D3 = 2, 8, 8, 32
    x3 = jax.random.normal(k3, (B3, H3, S3, D3), dtype=jnp.bfloat16)
    out3 = jax.block_until_ready(xpos_forward(x3, head_dim=D3))
    sin3, cos3 = xpos_tables(D3, S3)
    ref3 = xpos_ref(x3.astype(jnp.float32), sin3, cos3)
    np.testing.assert_allclose(np.asarray(out3, dtype=np.float32),
                               np.asarray(ref3), rtol=3e-2, atol=3e-2)

    print("KERNEL_OK")
</pallas_src>

<mosaic_0001>
module attributes {stable_mosaic.version = 11 : i64} {
  func.func @xpos_kernel(%arg0: i32, %arg1: i32, %arg2: memref<8x256xf32, #tpu.memory_space<vmem>>, %arg3: memref<1x256xf32, #tpu.memory_space<vmem>>, %arg4: memref<1x256xf32, #tpu.memory_space<vmem>>, %arg5: memref<1x256xf32, #tpu.memory_space<vmem>>, %arg6: memref<8x256xf32, #tpu.memory_space<vmem>>) attributes {dimension_semantics = [#tpu.dimension_semantics<parallel>, #tpu.dimension_semantics<parallel>], iteration_bounds = array<i64: 1, 1>, scalar_prefetch = 0 : i64, scratch_operands = 0 : i64, tpu.core_type = #tpu.core_type<tc>, window_params = [{transform_indices = @transform_0, window_bounds = array<i64: 8, 256>}, {transform_indices = @transform_1, window_bounds = array<i64: 1, 256>}, {transform_indices = @transform_2, window_bounds = array<i64: 1, 256>}, {transform_indices = @transform_3, window_bounds = array<i64: 1, 256>}, {transform_indices = @transform_4, window_bounds = array<i64: 8, 256>}]} {
    %c0 = arith.constant 0 : index
    %c0_0 = arith.constant 0 : index
    %0 = vector.load %arg2[%c0, %c0_0] : memref<8x256xf32, #tpu.memory_space<vmem>>, vector<8x256xf32>
    %c255_i32 = arith.constant 255 : i32
    %1 = tpu.dynamic_rotate %0 by %c255_i32 dim 1 : vector<8x256xf32>, i32 -> vector<8x256xf32>
    %c1_i32 = arith.constant 1 : i32
    %2 = tpu.dynamic_rotate %0 by %c1_i32 dim 1 : vector<8x256xf32>, i32 -> vector<8x256xf32>
    %c0_1 = arith.constant 0 : index
    %c0_2 = arith.constant 0 : index
    %3 = vector.load %arg5[%c0_1, %c0_2] : memref<1x256xf32, #tpu.memory_space<vmem>>, vector<1x256xf32>
    %4 = vector.broadcast %3 : vector<1x256xf32> to vector<8x256xf32>
    %5 = arith.mulf %0, %4 : vector<8x256xf32>
    %c0_3 = arith.constant 0 : index
    %c0_4 = arith.constant 0 : index
    %6 = vector.load %arg3[%c0_3, %c0_4] : memref<1x256xf32, #tpu.memory_space<vmem>>, vector<1x256xf32>
    %7 = vector.broadcast %6 : vector<1x256xf32> to vector<8x256xf32>
    %8 = arith.mulf %1, %7 : vector<8x256xf32>
    %9 = arith.addf %5, %8 : vector<8x256xf32>
    %c0_5 = arith.constant 0 : index
    %c0_6 = arith.constant 0 : index
    %10 = vector.load %arg4[%c0_5, %c0_6] : memref<1x256xf32, #tpu.memory_space<vmem>>, vector<1x256xf32>
    %11 = vector.broadcast %10 : vector<1x256xf32> to vector<8x256xf32>
    %12 = arith.mulf %2, %11 : vector<8x256xf32>
    %13 = arith.addf %9, %12 : vector<8x256xf32>
    %c0_7 = arith.constant 0 : index
    %c0_8 = arith.constant 0 : index
    %14 = vector.load %arg6[%c0_7, %c0_8] : memref<8x256xf32, #tpu.memory_space<vmem>>, vector<8x256xf32>
    tpu.vector_store %arg6[%c0_7, %c0_8], %13 {strides = array<i32>} : memref<8x256xf32, #tpu.memory_space<vmem>>, vector<8x256xf32>,
    return
  }
  func.func @transform_0(%arg0: i32, %arg1: i32) -> (i32, i32) {
    %c0_i32 = arith.constant 0 : i32
    return %arg1, %arg0 : i32, i32
  }
  func.func @transform_1(%arg0: i32, %arg1: i32) -> (i32, i32) {
    %c0_i32 = arith.constant 0 : i32
    %c0_i32_0 = arith.constant 0 : i32
    return %c0_i32, %arg0 : i32, i32
  }
  func.func @transform_2(%arg0: i32, %arg1: i32) -> (i32, i32) {
    %c0_i32 = arith.constant 0 : i32
    %c0_i32_0 = arith.constant 0 : i32
    return %c0_i32, %arg0 : i32, i32
  }
  func.func @transform_3(%arg0: i32, %arg1: i32) -> (i32, i32) {
    %c0_i32 = arith.constant 0 : i32
    %c0_i32_0 = arith.constant 0 : i32
    return %c0_i32, %arg0 : i32, i32
  }
  func.func @transform_4(%arg0: i32, %arg1: i32) -> (i32, i32) {
    %c0_i32 = arith.constant 0 : i32
    return %arg1, %arg0 : i32, i32
  }
}

</mosaic_0001>

<llo_original>
// kernel: tpu_custom_call.1
$region0: #{tpu_custom_call.1}
  #allocation0 [shape = 'u32[]', space=smem, size = 0x4, offset = 0x4, fixed_abs, tag = 'smem constant byte address 0x4 - core index']
  #allocation1 [shape = 'u32[144,128]{1,0:T(1,128)}', space=vmem, size = 0x12000, scoped, tag = 'internal scratch']
  %s0 = inlined_call_operand.hbm [shape: f32[8,256], index: 0, kind: input, shape index: {}]
  %s1 = inlined_call_operand.hbm [shape: f32[1,256], index: 1, kind: input, shape index: {}]
  %s2 = inlined_call_operand.vmem [shape: f32[1,256], index: 2, kind: input, shape index: {}]
  %s3 = inlined_call_operand.vmem [shape: f32[1,256], index: 3, kind: input, shape index: {}]
  %s4 = inlined_call_operand.hbm [shape: f32[8,256], index: 4, kind: output, shape index: {}]
  %s5 = sld [smem:[#allocation0]]
  $region34: #{tpu_custom_call.1} parent=0
    _
  %s7 = ssub.s32 1, %s5
  %s8 = scalar_select 0, %s7, %s5
  $region1: #{tpu_custom_call.1} parent=0
    #allocation2 [shape = 'u8[8192]{0}', space=vmem, size = 0x2000, scoped, tag = 'input window, operand 0, single buffered']
    #allocation3 [shape = 's32[1]{0}', space=sflag, size = 0x4, scoped, tag = 'scoped memory for tpu_custom_call.1']
    #allocation4 [shape = 's32[1]{0}', space=sflag, size = 0x4, scoped, tag = 'scoped memory for tpu_custom_call.1']
    #allocation5 [shape = 'u8[1024]{0}', space=vmem, size = 0x400, scoped, tag = 'input window, operand 1, single buffered']
    #allocation6 [shape = 's32[1]{0}', space=sflag, size = 0x4, scoped, tag = 'scoped memory for tpu_custom_call.1']
    #allocation7 [shape = 'u8[8192]{0}', space=vmem, size = 0x2000, scoped, tag = 'output window, operand 0, single buffered']
    %9 = vsyncpa [#allocation3], 0
    %10 = vsyncpa [#allocation6], 0
    %11 = vsyncpa [#allocation4], 0
    // Predicated region
    $region2: #{tpu_custom_call.1} parent=1 // pred_check
      _
    $region3: #{tpu_custom_call.1} parent=1 // pred_check_branch
      %13 = sbr.rel (0) target = $region5
    $region4: #{tpu_custom_call.1} parent=1 // pred_region
      %s15 = ssub.s32 256, 256
      %16 = vsyncadd [#allocation3], %s15
      %s18 = sshll.u32 [#allocation2], 4
      %s19 = int_to_ptr.vmem [resolvable:$true] %s18
      %21 = dma.hbm_to_vmem [thread:$0]  %s0, 256, %s19, [#allocation3]
    $region5: #{tpu_custom_call.1} parent=1 // pred_fallthru
      _
    // Predicated region
    $region6: #{tpu_custom_call.1} parent=1 // pred_check
      _
    $region7: #{tpu_custom_call.1} parent=1 // pred_check_branch
      %23 = sbr.rel (0) target = $region9
    $region8: #{tpu_custom_call.1} parent=1 // pred_region
      %s25 = ssub.s32 32, 32
      %26 = vsyncadd [#allocation6], %s25
      %s28 = sshll.u32 [#allocation5], 4
      %s29 = int_to_ptr.vmem [resolvable:$true] %s28
      %31 = dma.hbm_to_vmem [thread:$0]  %s1, 32, %s29, [#allocation6]
    $region9: #{tpu_custom_call.1} parent=1 // pred_fallthru
      _
    // Predicated region
    $region10: #{tpu_custom_call.1} parent=1 // pred_check
      _
    $region11: #{tpu_custom_call.1} parent=1 // pred_check_branch
      %33 = sbr.rel (0) target = $region13
    $region12: #{tpu_custom_call.1} parent=1 // pred_region
      _
    $region13: #{tpu_custom_call.1} parent=1 // pred_fallthru
      _
    // Predicated region
    $region14: #{tpu_custom_call.1} parent=1 // pred_check
      _
    $region15: #{tpu_custom_call.1} parent=1 // pred_check_branch
      %35 = sbr.rel (0) target = $region17
    $region16: #{tpu_custom_call.1} parent=1 // pred_region
      _
    $region17: #{tpu_custom_call.1} parent=1 // pred_fallthru
      _
    // Predicated region
    $region18: #{tpu_custom_call.1} parent=1 // pred_check
      _
    $region19: #{tpu_custom_call.1} parent=1 // pred_check_branch
      %37 = sbr.rel (0) target = $region21
    $region20: #{tpu_custom_call.1} parent=1 // pred_region
      %38 = dma.done [#allocation3], 256
    $region21: #{tpu_custom_call.1} parent=1 // pred_fallthru
      _
    // Predicated region
    $region22: #{tpu_custom_call.1} parent=1 // pred_check
      _
    $region23: #{tpu_custom_call.1} parent=1 // pred_check_branch
      %40 = sbr.rel (0) target = $region25
    $region24: #{tpu_custom_call.1} parent=1 // pred_region
      %41 = dma.done [#allocation6], 32
    $region25: #{tpu_custom_call.1} parent=1 // pred_fallthru
      _
    %v42 = vld [vmem:[#allocation2] sm:$0xff]
    %v43 = vld [vmem:[#allocation2 + $0x8] sm:$0xff]
    %44 = vrot.lane.b32.xlu0 %v42, 127
    %v45 = vpop.permute.xlu0 %44
    %46 = vrot.lane.b32.xlu0 %v43, 127
    %v47 = vpop.permute.xlu0 %46
    %v48 = vlaneseq
    %v49 = vand.u32 %v48, 127
    %vm50 = vcmp.lt.s32.totalorder %v49, 127
    %v51 = vsel %vm50, %v45, %v47
    %v52 = vsel %vm50, %v47, %v45
    %53 = vrot.lane.b32.xlu0 %v42, 1
    %v54 = vpop.permute.xlu0 %53
    %55 = vrot.lane.b32.xlu0 %v43, 1
    %v56 = vpop.permute.xlu0 %55
    %vm57 = vcmp.lt.s32.totalorder %v49, 1
    %v58 = vsel %vm57, %v54, %v56
    %v59 = vsel %vm57, %v56, %v54
    %v60 = vld [vmem:[%s3] sm:$0x3]
    %v62 = vlaneseq
    %v63 = vshrl.u32 %v62, 7
    %v64 = vsub.s32 0, %v63
    %v65 = vrot.slane %v60, %v64
    %v66 = vlaneseq
    %v67 = vshrl.u32 %v66, 7
    %v68 = vsub.s32 1, %v67
    %v69 = vrot.slane %v60, %v68
    %v72 = vmul.f32 %v42, %v65
    %v73 = vmul.f32 %v43, %v69
    %v74 = vld [vmem:[#allocation5] sm:$0x3]
    %v76 = vlaneseq
    %v77 = vshrl.u32 %v76, 7
    %v78 = vsub.s32 0, %v77
    %v79 = vrot.slane %v74, %v78
    %v80 = vlaneseq
    %v81 = vshrl.u32 %v80, 7
    %v82 = vsub.s32 1, %v81
    %v83 = vrot.slane %v74, %v82
    %v86 = vmul.f32 %v51, %v79
    %v87 = vmul.f32 %v52, %v83
    %v88 = vadd.f32 %v72, %v86
    %v89 = vadd.f32 %v73, %v87
    %v90 = vld [vmem:[%s2] sm:$0x3]
    %v92 = vlaneseq
    %v93 = vshrl.u32 %v92, 7
    %v94 = vsub.s32 0, %v93
    %v95 = vrot.slane %v90, %v94
    %v96 = vlaneseq
    %v97 = vshrl.u32 %v96, 7
    %v98 = vsub.s32 1, %v97
    %v99 = vrot.slane %v90, %v98
    %v102 = vmul.f32 %v59, %v95
    %v103 = vmul.f32 %v58, %v99
    %v104 = vadd.f32 %v88, %v102
    %v105 = vadd.f32 %v89, %v103
    %106 = vst [vmem:[#allocation7] sm:$0xff] %v104
    %107 = vst [vmem:[#allocation7 + $0x8] sm:$0xff] %v105
    // Predicated region
    $region26: #{tpu_custom_call.1} parent=1 // pred_check
      _
    $region27: #{tpu_custom_call.1} parent=1 // pred_check_branch
      %109 = sbr.rel (0) target = $region29
    $region28: #{tpu_custom_call.1} parent=1 // pred_region
      %s111 = ssub.s32 256, 256
      %112 = vsyncadd [#allocation4], %s111
      %s114 = sshll.u32 [#allocation7], 4
      %s115 = int_to_ptr.vmem [resolvable:$true] %s114
      %117 = dma.vmem_to_hbm [thread:$0]  %s115, 256, %s4, [#allocation4]
    $region29: #{tpu_custom_call.1} parent=1 // pred_fallthru
      _
    // Predicated region
    $region30: #{tpu_custom_call.1} parent=1 // pred_check
      _
    $region31: #{tpu_custom_call.1} parent=1 // pred_check_branch
      %119 = sbr.rel (0) target = $region33
    $region32: #{tpu_custom_call.1} parent=1 // pred_region
      %120 = dma.done [#allocation4], 256
    $region33: #{tpu_custom_call.1} parent=1 // pred_fallthru
      _
    %121 = vsyncpa [#allocation3], 1
    %122 = vsyncpa [#allocation6], 1
    %123 = vsyncpa [#allocation4], 1

</llo_original>
